<compile_context>
chip_gen: v7x
topology: tpu7x:2x2x1
jax: 0.10.0
libtpu: 0.0.40
codegen_flags: <defaults>
</compile_context>

<pallas_src>
import functools

import jax
import jax.numpy as jnp
from jax.experimental import pallas as pl
from jax.experimental.pallas import tpu as pltpu


def _round_up(x, m):
    return ((x + m - 1) // m) * m


def _gather_concat_kernel(ids_ref, *refs, has_feats):
    """One row tile: out = [feats | T[ids]] (single full-width store)."""
    if has_feats:
        feats_ref, t_ref, o_ref = refs
    else:
        t_ref, o_ref = refs

    ids = ids_ref[...]                                    # (bm, 1) int32
    bm = ids.shape[0]
    vocab = t_ref.shape[0]

    # One-hot gather on the MXU: exact (1.0 * row + 0.0 * rest), vectorized,
    # no data-dependent addressing inside the kernel.
    iota = jax.lax.broadcasted_iota(jnp.int32, (bm, vocab), 1)
    onehot = (iota == ids).astype(t_ref.dtype)            # (bm, vocab)
    embs = jnp.dot(onehot, t_ref[...], preferred_element_type=jnp.float32)

    if has_feats:
        out = jnp.concatenate([feats_ref[...].astype(jnp.float32), embs],
                              axis=-1)
    else:
        out = embs
    o_ref[...] = out.astype(o_ref.dtype)


def _fused_gather_concat(ids2d, feats, t_pad, out_dtype, out_w, *, block_rows):
    """pallas_call wrapper: out[i] = concat(feats[i], t_pad[ids2d[i, 0]])."""
    n = ids2d.shape[0]
    vpad, emb_dim = t_pad.shape
    has_feats = feats is not None

    # Row tile: as large as requested, but keep >= 2 grid steps when possible
    # so dimension_semantics=('parallel',) can shard rows across v7x's 2 TCs.
    bm = max(8, min(int(block_rows), _round_up(pl.cdiv(n, 2), 8)))
    grid = (pl.cdiv(n, bm),)          # ragged last tile is clipped by Pallas

    in_specs = [pl.BlockSpec((bm, 1), lambda i: (i, 0))]          # ids tile
    args = [ids2d]
    if has_feats:
        f_w = feats.shape[1]
        in_specs.append(pl.BlockSpec((bm, f_w), lambda i: (i, 0)))  # feats tile
        args.append(feats)
    in_specs.append(pl.BlockSpec((vpad, emb_dim), lambda i: (0, 0)))  # T resident
    args.append(t_pad)

    feat_bytes = feats.size * feats.dtype.itemsize if has_feats else 0
    cost = pl.CostEstimate(
        flops=2 * n * vpad * emb_dim,
        transcendentals=0,
        bytes_accessed=(ids2d.size * ids2d.dtype.itemsize
                        + feat_bytes
                        + t_pad.size * t_pad.dtype.itemsize
                        + n * out_w * jnp.dtype(out_dtype).itemsize),
    )

    return pl.pallas_call(
        functools.partial(_gather_concat_kernel, has_feats=has_feats),
        out_shape=jax.ShapeDtypeStruct((n, out_w), out_dtype),
        grid=grid,
        in_specs=in_specs,
        out_specs=pl.BlockSpec((bm, out_w), lambda i: (i, 0)),
        compiler_params=pltpu.CompilerParams(
            dimension_semantics=("parallel",),
            vmem_limit_bytes=32 * 1024 * 1024,
        ),
        cost_estimate=cost,
    )(*args)


def node_embedding_prep(ids, feats, params, *, n_nodes, input_dim,
                        embedding_dim, layer_idx=0, block_rows=4096,
                        min_pallas_rows=1024, max_pallas_vocab=1024):
    """JAX/Pallas equivalent of NodeEmbeddingPrep.forward."""
    emb_table = params["embedding"]          # [n_nodes + 1, E]
    fc_w = params["fc_w"]                    # [E, E]  (out, in)
    fc_b = params["fc_b"]                    # [E]

    # Linear commutes with the gather: transform the (tiny) table once, then
    # the whole forward pass is a gather (+ concat).
    t = emb_table @ fc_w.T + fc_b            # [n_nodes + 1, E]
    vocab = t.shape[0]

    n = ids.shape[0]
    if layer_idx > 0:
        ids_used = ids.astype(jnp.int32)
    else:
        # Sentinel path: every row uses emb_table[n_nodes].
        ids_used = jnp.full((n,), n_nodes, dtype=jnp.int32)

    if input_dim:
        out_dtype = jnp.result_type(feats.dtype, t.dtype)
        out_w = input_dim + embedding_dim
    else:
        out_dtype = t.dtype
        out_w = embedding_dim

    use_pallas = (n >= min_pallas_rows) and (vocab <= max_pallas_vocab)
    if not use_pallas:
        # Tiny batch (pallas_call fixed cost dominates) or vocabulary too big
        # to keep resident / one-hot against: XLA gather from the transformed
        # table is already a single HBM pass.
        # TODO(synk): manual-DMA row-gather Pallas path for very large tables.
        lin = jnp.take(t, ids_used, axis=0)
        if input_dim:
            return jnp.concatenate([feats, lin], axis=1).astype(out_dtype)
        return lin

    vpad = _round_up(vocab, 8)
    t_pad = jnp.pad(t, ((0, vpad - vocab), (0, 0))) if vpad != vocab else t
    ids2d = ids_used.reshape(n, 1)
    return _fused_gather_concat(ids2d, feats if input_dim else None, t_pad,
                                out_dtype, out_w, block_rows=block_rows)


def _reference(ids, feats, params, *, n_nodes, input_dim, layer_idx=0):
    emb_table = params["embedding"]
    ids_used = ids if layer_idx > 0 else jnp.zeros_like(ids) + n_nodes
    embs = jnp.take(emb_table, ids_used, axis=0)
    embs = embs @ params["fc_w"].T + params["fc_b"]
    if input_dim:
        return jnp.concatenate([feats, embs], axis=1)
    return embs


if __name__ == "__main__":
    n_nodes = 10
    input_dim = 32
    embedding_dim = 64

    key = jax.random.PRNGKey(0)
    k_emb, k_w, k_b, k_feat, k_ids = jax.random.split(key, 5)

    params = {
        "embedding": jax.random.normal(k_emb, (n_nodes + 1, embedding_dim),
                                       dtype=jnp.float32) * 0.1,
        "fc_w": jax.random.normal(k_w, (embedding_dim, embedding_dim),
                                  dtype=jnp.float32) * 0.1,
        "fc_b": jax.random.normal(k_b, (embedding_dim,),
                                  dtype=jnp.float32) * 0.1,
    }

    # Correctness of the fused Pallas path (forced even at small N), including
    # ragged row counts (partial last tile) and both layer_idx branches.
    for N in (8, 37, 300):
        ids = jax.random.randint(k_ids, (N,), 0, n_nodes, dtype=jnp.int32)
        feats = jax.random.normal(k_feat, (N, input_dim), dtype=jnp.float32)
        for layer_idx in (0, 1):
            out = node_embedding_prep(ids, feats, params,
                                      n_nodes=n_nodes, input_dim=input_dim,
                                      embedding_dim=embedding_dim,
                                      layer_idx=layer_idx,
                                      min_pallas_rows=0)
            out = jax.block_until_ready(out)
            ref = _reference(ids, feats, params, n_nodes=n_nodes,
                             input_dim=input_dim, layer_idx=layer_idx)
            assert out.shape == (N, input_dim + embedding_dim)
            assert jnp.allclose(out, ref, atol=1e-5, rtol=1e-5), (
                f"mismatch at N={N} layer_idx={layer_idx}")

    # input_dim == 0 path (module returns embs only), Pallas path forced.
    N = 16
    ids = jax.random.randint(k_ids, (N,), 0, n_nodes, dtype=jnp.int32)
    out = node_embedding_prep(ids, None, params, n_nodes=n_nodes, input_dim=0,
                              embedding_dim=embedding_dim, layer_idx=1,
                              min_pallas_rows=0)
    out = jax.block_until_ready(out)
    ref = _reference(ids, None, params, n_nodes=n_nodes, input_dim=0,
                     layer_idx=1)
    assert out.shape == (N, embedding_dim)
    assert jnp.allclose(out, ref, atol=1e-5, rtol=1e-5)

    # Production-shaped run with default tiling (large tiles, >= 2 grid steps).
    N = 4096
    ids = jax.random.randint(k_ids, (N,), 0, n_nodes, dtype=jnp.int32)
    feats = jax.random.normal(k_feat, (N, input_dim), dtype=jnp.float32)
    out = node_embedding_prep(ids, feats, params, n_nodes=n_nodes,
                              input_dim=input_dim,
                              embedding_dim=embedding_dim, layer_idx=1)
    out = jax.block_until_ready(out)
    ref = _reference(ids, feats, params, n_nodes=n_nodes,
                     input_dim=input_dim, layer_idx=1)
    assert jnp.allclose(out, ref, atol=1e-5, rtol=1e-5)

    # Small-N XLA fallback (default thresholds -> no pallas_call).
    N = 8
    ids = jax.random.randint(k_ids, (N,), 0, n_nodes, dtype=jnp.int32)
    feats = jax.random.normal(k_feat, (N, input_dim), dtype=jnp.float32)
    out = node_embedding_prep(ids, feats, params, n_nodes=n_nodes,
                              input_dim=input_dim,
                              embedding_dim=embedding_dim, layer_idx=1)
    out = jax.block_until_ready(out)
    ref = _reference(ids, feats, params, n_nodes=n_nodes,
                     input_dim=input_dim, layer_idx=1)
    assert jnp.allclose(out, ref, atol=1e-5, rtol=1e-5)

    print("KERNEL_OK")
</pallas_src>

<mosaic_0001>
module attributes {stable_mosaic.version = 11 : i64} {
  func.func @_gather_concat_kernel(%arg0: i32, %arg1: memref<8x1xi32, #tpu.memory_space<vmem>>, %arg2: memref<8x32xf32, #tpu.memory_space<vmem>>, %arg3: memref<16x64xf32, #tpu.memory_space<vmem>>, %arg4: memref<8x96xf32, #tpu.memory_space<vmem>>) attributes {dimension_semantics = [#tpu.dimension_semantics<parallel>], iteration_bounds = array<i64: 1>, scalar_prefetch = 0 : i64, scratch_operands = 0 : i64, tpu.core_type = #tpu.core_type<tc>, window_params = [{transform_indices = @transform_0, window_bounds = array<i64: 8, 1>}, {transform_indices = @transform_1, window_bounds = array<i64: 8, 32>}, {pipeline_mode = #tpu.pipeline_mode<synchronous>, transform_indices = @transform_2, window_bounds = array<i64: 16, 64>}, {transform_indices = @transform_3, window_bounds = array<i64: 8, 96>}]} {
    %c0 = arith.constant 0 : index
    %c0_0 = arith.constant 0 : index
    %0 = vector.load %arg1[%c0, %c0_0] : memref<8x1xi32, #tpu.memory_space<vmem>>, vector<8x1xi32>
    %1 = tpu.iota {dimensions = array<i32: 1>} : vector<8x16xi32>
    %2 = vector.broadcast %0 : vector<8x1xi32> to vector<8x16xi32>
    %3 = arith.cmpi eq, %1, %2 : vector<8x16xi32>
    %4 = arith.extui %3 : vector<8x16xi1> to vector<8x16xi32>
    %5 = arith.sitofp %4 : vector<8x16xi32> to vector<8x16xf32>
    %c0_1 = arith.constant 0 : index
    %c0_2 = arith.constant 0 : index
    %6 = vector.load %arg3[%c0_1, %c0_2] : memref<16x64xf32, #tpu.memory_space<vmem>>, vector<16x64xf32>
    %cst = arith.constant dense<0.000000e+00> : vector<8x64xf32>
    %7 = tpu.matmul %5, %6, %cst {dimension_numbers = #tpu.dot_dimension_numbers<[1], [0], [0], [1], [0, 0, 1, 1], [], []>} : vector<8x16xf32>, vector<16x64xf32>, vector<8x64xf32> -> vector<8x64xf32>
    %c0_3 = arith.constant 0 : index
    %c0_4 = arith.constant 0 : index
    %8 = vector.load %arg2[%c0_3, %c0_4] : memref<8x32xf32, #tpu.memory_space<vmem>>, vector<8x32xf32>
    %9 = tpu.concatenate %8, %7 in 1 : vector<8x32xf32>, vector<8x64xf32> -> vector<8x96xf32>
    %c0_5 = arith.constant 0 : index
    %c0_6 = arith.constant 0 : index
    %10 = vector.load %arg4[%c0_5, %c0_6] : memref<8x96xf32, #tpu.memory_space<vmem>>, vector<8x96xf32>
    tpu.vector_store %arg4[%c0_5, %c0_6], %9 {strides = array<i32>} : memref<8x96xf32, #tpu.memory_space<vmem>>, vector<8x96xf32>,
    return
  }
  func.func @transform_0(%arg0: i32) -> (i32, i32) {
    %c0_i32 = arith.constant 0 : i32
    %c0_i32_0 = arith.constant 0 : i32
    return %arg0, %c0_i32 : i32, i32
  }
  func.func @transform_1(%arg0: i32) -> (i32, i32) {
    %c0_i32 = arith.constant 0 : i32
    %c0_i32_0 = arith.constant 0 : i32
    return %arg0, %c0_i32 : i32, i32
  }
  func.func @transform_2(%arg0: i32) -> (i32, i32) {
    %c0_i32 = arith.constant 0 : i32
    %c0_i32_0 = arith.constant 0 : i32
    %c0_i32_1 = arith.constant 0 : i32
    return %c0_i32, %c0_i32_0 : i32, i32
  }
  func.func @transform_3(%arg0: i32) -> (i32, i32) {
    %c0_i32 = arith.constant 0 : i32
    %c0_i32_0 = arith.constant 0 : i32
    return %arg0, %c0_i32 : i32, i32
  }
}

</mosaic_0001>

<llo_original>
// kernel: tpu_custom_call.1
$region0: #{tpu_custom_call.1}
  #allocation0 [shape = 'u32[]', space=smem, size = 0x4, offset = 0x4, fixed_abs, tag = 'smem constant byte address 0x4 - core index']
  #allocation1 [shape = 'u32[144,128]{1,0:T(1,128)}', space=vmem, size = 0x12000, scoped, tag = 'internal scratch']
  %s0 = inlined_call_operand.vmem [shape: s32[8,1], index: 0, kind: input, shape index: {}]
  %s1 = inlined_call_operand.hbm [shape: f32[8,32], index: 1, kind: input, shape index: {}]
  %s2 = inlined_call_operand.vmem [shape: f32[16,64], index: 2, kind: input, shape index: {}]
  %s3 = inlined_call_operand.hbm [shape: f32[8,96], index: 3, kind: output, shape index: {}]
  %s4 = sld [smem:[#allocation0]]
  $region26: #{tpu_custom_call.1} parent=0
    _
  %s6 = ssub.s32 1, %s4
  %s7 = scalar_select 0, %s6, %s4
  $region1: #{tpu_custom_call.1} parent=0
    #allocation2 [shape = 'u8[4096]{0}', space=vmem, size = 0x1000, scoped, tag = 'input window, operand 1, single buffered']
    #allocation3 [shape = 's32[1]{0}', space=sflag, size = 0x4, scoped, tag = 'scoped memory for tpu_custom_call.1']
    #allocation4 [shape = 's32[1]{0}', space=sflag, size = 0x4, scoped, tag = 'scoped memory for tpu_custom_call.1']
    #allocation5 [shape = 'u8[4096]{0}', space=vmem, size = 0x1000, scoped, tag = 'output window, operand 0, single buffered']
    %8 = vsyncpa [#allocation3], 0
    %9 = vsyncpa [#allocation4], 0
    // Predicated region
    $region2: #{tpu_custom_call.1} parent=1 // pred_check
      _
    $region3: #{tpu_custom_call.1} parent=1 // pred_check_branch
      %11 = sbr.rel (0) target = $region5
    $region4: #{tpu_custom_call.1} parent=1 // pred_region
      _
    $region5: #{tpu_custom_call.1} parent=1 // pred_fallthru
      _
    // Predicated region
    $region6: #{tpu_custom_call.1} parent=1 // pred_check
      _
    $region7: #{tpu_custom_call.1} parent=1 // pred_check_branch
      %13 = sbr.rel (0) target = $region9
    $region8: #{tpu_custom_call.1} parent=1 // pred_region
      %s15 = ssub.s32 128, 128
      %16 = vsyncadd [#allocation3], %s15
      %s18 = sshll.u32 [#allocation2], 4
      %s19 = int_to_ptr.vmem [resolvable:$true] %s18
      %21 = dma.hbm_to_vmem [thread:$0]  %s1, 128, %s19, [#allocation3]
    $region9: #{tpu_custom_call.1} parent=1 // pred_fallthru
      _
    // Predicated region
    $region10: #{tpu_custom_call.1} parent=1 // pred_check
      _
    $region11: #{tpu_custom_call.1} parent=1 // pred_check_branch
      %23 = sbr.rel (0) target = $region13
    $region12: #{tpu_custom_call.1} parent=1 // pred_region
      _
    $region13: #{tpu_custom_call.1} parent=1 // pred_fallthru
      _
    // Predicated region
    $region14: #{tpu_custom_call.1} parent=1 // pred_check
      _
    $region15: #{tpu_custom_call.1} parent=1 // pred_check_branch
      %25 = sbr.rel (0) target = $region17
    $region16: #{tpu_custom_call.1} parent=1 // pred_region
      %26 = dma.done [#allocation3], 128
    $region17: #{tpu_custom_call.1} parent=1 // pred_fallthru
      _
    %v27 = vld [vmem:[%s0] sm:$0xff]
    %v28 = vlaneseq
    %v29 = vand.u32 %v28, 127
    %30 = vset.pattern.permute.xlu0 0
    %31 = vperm.xlu0 %30, %v27
    %v32 = vpop.permute.xlu0 %31
    %vm33 = vcmp.eq.s32.totalorder %v29, %v32
    %v34 = vsel %vm33, 1, 0
    %v35 = vcvt.s32.f32 %v34
    %v36 = vld [vmem:[%s2] sm:$0xff]
    %v37 = vld [vmem:[%s2 + $0x8] sm:$0xff]
    %vm38 = vcmask 130048
    %v40 = vsel %vm38, %v35, 0
    %42 = vmatprep.subr.mxu0 0.0
    %43 = vmatpush1.msra.mxu0 %v36
    %44 = vmatprep.subr.mxu0 0.0
    %45 = vmatpush1.msra.mxu0 %v37
    %46 = vmatprep.subr.mxu0 0.0
    %47 = vmatpush1.msra.mxu0 0.0
    %48 = vmatprep.subr.mxu0 0.0
    %49 = vmatpush1.msra.mxu0 0.0
    %50 = vmatprep.subr.mxu0 0.0
    %51 = vmatpush1.msra.mxu0 0.0
    %52 = vmatprep.subr.mxu0 0.0
    %53 = vmatpush1.msra.mxu0 0.0
    %54 = vmatprep.subr.mxu0 0.0
    %55 = vmatpush1.msra.mxu0 0.0
    %56 = vmatprep.subr.mxu0 0.0
    %57 = vmatpush1.msra.mxu0 0.0
    %58 = vmatprep.subr.mxu0 0.0
    %59 = vmatpush1.msra.mxu0 0.0
    %60 = vmatprep.subr.mxu0 0.0
    %61 = vmatpush1.msra.mxu0 0.0
    %62 = vmatprep.subr.mxu0 0.0
    %63 = vmatpush1.msra.mxu0 0.0
    %64 = vmatprep.subr.mxu0 0.0
    %65 = vmatpush1.msra.mxu0 0.0
    %66 = vmatprep.subr.mxu0 0.0
    %67 = vmatpush1.msra.mxu0 0.0
    %68 = vmatprep.subr.mxu0 0.0
    %69 = vmatpush1.msra.mxu0 0.0
    %70 = vmatprep.subr.mxu0 0.0
    %71 = vmatpush1.msra.mxu0 0.0
    %72 = vmatprep.subr.mxu0 0.0
    %73 = vmatpush1.msra.mxu0 0.0
    %74 = vmatprep.subr.mxu0 0.0
    %75 = vmatpush1.msra.mxu0 0.0
    %76 = vmatprep.subr.mxu0 0.0
    %77 = vmatpush1.msra.mxu0 0.0
    %78 = vmatprep.subr.mxu0 0.0
    %79 = vmatpush1.msra.mxu0 0.0
    %80 = vmatprep.subr.mxu0 0.0
    %81 = vmatpush1.msra.mxu0 0.0
    %82 = vmatprep.subr.mxu0 0.0
    %83 = vmatpush1.msra.mxu0 0.0
    %84 = vmatprep.subr.mxu0 0.0
    %85 = vmatpush1.msra.mxu0 0.0
    %86 = vmatprep.subr.mxu0 0.0
    %87 = vmatpush1.msra.mxu0 0.0
    %88 = vmatprep.subr.mxu0 0.0
    %89 = vmatpush1.msra.mxu0 0.0
    %90 = vmatprep.subr.mxu0 0.0
    %91 = vmatpush1.msra.mxu0 0.0
    %92 = vmatprep.subr.mxu0 0.0
    %93 = vmatpush1.msra.mxu0 0.0
    %94 = vmatprep.subr.mxu0 0.0
    %95 = vmatpush1.msra.mxu0 0.0
    %96 = vmatprep.subr.mxu0 0.0
    %97 = vmatpush1.msra.mxu0 0.0
    %98 = vmatprep.subr.mxu0 0.0
    %99 = vmatpush1.msra.mxu0 0.0
    %100 = vmatprep.subr.mxu0 0.0
    %101 = vmatpush1.msra.mxu0 0.0
    %102 = vmatprep.subr.mxu0 0.0
    %103 = vmatpush1.msra.mxu0 0.0
    %104 = vmatprep.subr.mxu0 0.0
    %105 = vmatpush1.msra.mxu0 0.0
    %106 = vmatprep.mubr.f32.mxu0 0.0
    %107 = vmatmul.mubr.f32.gmra.mrb[0].mxu0 %v40
    %v108 = vpop.f32.mrb[0].mxu0
    %v109 = vadd.f32 0.0, %v108
    %v110 = vpop.f32.mrb[0].mxu0
    %111 = vdwg.mxu0
    %v112 = vld [vmem:[#allocation2] sm:$0xff]
    %114 = vrot.lane.b32.xlu0 %v109, 32
    %v115 = vpop.permute.xlu0 %114
    %vm117 = vcmask 261120
    %v118 = vsel %vm117, %v112, %v115
    %vm119 = vcmask 785408
    %120 = vst.msk [vmem:[#allocation5] sm:$0xff] %vm119, %v118
    // Predicated region
    $region18: #{tpu_custom_call.1} parent=1 // pred_check
      _
    $region19: #{tpu_custom_call.1} parent=1 // pred_check_branch
      %122 = sbr.rel (0) target = $region21
    $region20: #{tpu_custom_call.1} parent=1 // pred_region
      %s124 = ssub.s32 128, 128
      %125 = vsyncadd [#allocation4], %s124
      %s127 = sshll.u32 [#allocation5], 4
      %s128 = int_to_ptr.vmem [resolvable:$true] %s127
      %130 = dma.vmem_to_hbm [thread:$0]  %s128, 128, %s3, [#allocation4]
    $region21: #{tpu_custom_call.1} parent=1 // pred_fallthru
      _
    // Predicated region
    $region22: #{tpu_custom_call.1} parent=1 // pred_check
      _
    $region23: #{tpu_custom_call.1} parent=1 // pred_check_branch
      %132 = sbr.rel (0) target = $region25
    $region24: #{tpu_custom_call.1} parent=1 // pred_region
      %133 = dma.done [#allocation4], 128
    $region25: #{tpu_custom_call.1} parent=1 // pred_fallthru
      _
    %134 = vsyncpa [#allocation3], 1
    %135 = vsyncpa [#allocation4], 1

</llo_original>
